<compile_context>
chip_gen: v5e
topology: v5e:2x2
jax: 0.10.0
libtpu: 0.0.40
codegen_flags: <defaults>
</compile_context>

<pallas_src>
import functools

import jax
import jax.numpy as jnp
from jax import lax
from jax.experimental import pallas as pl
from jax.experimental.pallas import tpu as pltpu


_TB = 8  # batch tile = one f32 sublane tile -> full-vreg (8, 128) VPU ops


def _encoder_bow_kernel(idx_ref, emb_ref, out_ref, *, L, TB):
    # idx_ref : SMEM (B_pad * L,) int32  -- flattened token ids (scalar prefetch)
    # emb_ref : VMEM (V, D) float32      -- embedding table (constant block)
    # out_ref : VMEM (TB, D) float32     -- this grid step's output tile
    i = pl.program_id(0)
    D = emb_ref.shape[1]
    base = i * (TB * L)

    def step(j, acc):
        # Gather one token embedding per batch row of the tile and stack them
        # into a (TB, D) tile so the running max operates on whole vregs
        # instead of 1-sublane (1, 128) slices.
        rows = [
            emb_ref[pl.ds(idx_ref[base + b * L + j], 1), :]   # (1, D)
            for b in range(TB)
        ]
        tile = jnp.concatenate(rows, axis=0)                   # (TB, D)
        return jnp.maximum(acc, tile)

    init = jnp.full((TB, D), -jnp.inf, dtype=jnp.float32)
    # Bounded unroll: full unroll only for short sequences, partial otherwise
    # (full unroll at large L explodes code size / vreg live ranges).
    unroll = True if L <= 16 else 4
    pooled = lax.fori_loop(0, L, step, init, unroll=unroll)
    out_ref[...] = pooled.astype(out_ref.dtype)


def encoder_bow(indices, emb_table, dropout=0.0):
    """Bag-of-words encoder: embedding lookup + max-pool over the sequence.

    indices: (B, L) integer token ids; emb_table: (V, D) float32.
    Returns (B, D) float32. Matches eval-mode PyTorch (dropout == identity).
    """
    del dropout  # eval-mode: dropout is the identity
    B, L = indices.shape
    V, D = emb_table.shape

    # Clamp ids: Pallas performs no runtime bounds check on VMEM refs; an
    # out-of-range id would silently read adjacent VMEM.
    idx = jnp.clip(indices.astype(jnp.int32), 0, V - 1)

    # Pad the batch up to a multiple of the batch tile, and flatten the ids to
    # 1D so the SMEM-prefetched array is not padded to [ceil/8, ceil/128].
    TB = _TB
    B_pad = ((B + TB - 1) // TB) * TB
    if B_pad != B:
        idx = jnp.pad(idx, ((0, B_pad - B), (0, 0)))  # pad rows use token 0
    idx_flat = idx.reshape(B_pad * L)

    kernel = functools.partial(_encoder_bow_kernel, L=L, TB=TB)

    out = pl.pallas_call(
        kernel,
        out_shape=jax.ShapeDtypeStruct((B_pad, D), jnp.float32),
        grid_spec=pltpu.PrefetchScalarGridSpec(
            num_scalar_prefetch=1,                 # idx_flat -> SMEM
            grid=(B_pad // TB,),
            in_specs=[
                # Whole embedding table resident in VMEM (constant block index).
                # Fine for small demo vocab; TODO(synk): for realistic vocabs
                # keep the table in HBM (memory_space=pl.ANY) and DMA-gather
                # only the TB*L rows needed per step (and/or store it in bf16)
                # so it fits v7x's 64 MiB VMEM / v5e's 16 MiB scoped limit.
                pl.BlockSpec((V, D), lambda i, idx: (0, 0)),
            ],
            # One (TB, D) output tile per grid step -> pipelined writeback,
            # unmasked (8, 128) stores, and a safely parallelizable batch axis.
            out_specs=pl.BlockSpec((TB, D), lambda i, idx: (i, 0)),
        ),
        compiler_params=pltpu.CompilerParams(
            dimension_semantics=("parallel",),     # megacore-shards batch on v7x
        ),
    )(idx_flat, emb_table)

    return out[:B]


if __name__ == "__main__":
    B, L = 2, 8          # batch, sequence length
    V, D = 32, 128       # vocab size, embedding dim (lane-aligned)

    key = jax.random.PRNGKey(0)
    k_emb, k_idx = jax.random.split(key)

    emb_table = jax.random.normal(k_emb, (V, D), dtype=jnp.float32)
    indices = jax.random.randint(k_idx, (B, L), 0, V, dtype=jnp.int32)

    out = encoder_bow(indices, emb_table, dropout=0.5)
    out = jax.block_until_ready(out)

    # pure-JAX reference: embedding lookup then max over the sequence axis
    ref = jnp.max(emb_table[indices], axis=1)
    assert out.shape == (B, D)
    assert jnp.allclose(out, ref, atol=1e-6), "mismatch vs reference"

    print("KERNEL_OK")
</pallas_src>

<mosaic_0001>
module attributes {stable_mosaic.version = 11 : i64} {
  func.func @_encoder_bow_kernel(%arg0: i32, %arg1: memref<64xi32, #tpu.memory_space<smem>>, %arg2: memref<32x128xf32, #tpu.memory_space<vmem>>, %arg3: memref<8x128xf32, #tpu.memory_space<vmem>>) attributes {dimension_semantics = [#tpu.dimension_semantics<parallel>], iteration_bounds = array<i64: 1>, scalar_prefetch = 1 : i64, scratch_operands = 0 : i64, tpu.core_type = #tpu.core_type<tc>, window_params = [{pipeline_mode = #tpu.pipeline_mode<synchronous>, transform_indices = @transform_0, window_bounds = array<i64: 32, 128>}, {transform_indices = @transform_1, window_bounds = array<i64: 8, 128>}]} {
    %c64_i32 = arith.constant 64 : i32
    %0 = arith.muli %arg0, %c64_i32 : i32
    %cst = arith.constant 0xFF800000 : f32
    %1 = vector.broadcast %cst : f32 to vector<8x128xf32>
    %c0_i32 = arith.constant 0 : i32
    %c0_i32_0 = arith.constant 0 : i32
    %2 = arith.addi %0, %c0_i32_0 : i32
    %3 = arith.addi %2, %c0_i32 : i32
    %4 = arith.index_cast %3 : i32 to index
    %5 = memref.load %arg1[%4] : memref<64xi32, #tpu.memory_space<smem>>
    %6 = arith.index_cast %5 : i32 to index
    %c0 = arith.constant 0 : index
    %7 = vector.load %arg2[%6, %c0] : memref<32x128xf32, #tpu.memory_space<vmem>>, vector<1x128xf32>
    %c8_i32 = arith.constant 8 : i32
    %8 = arith.addi %0, %c8_i32 : i32
    %9 = arith.addi %8, %c0_i32 : i32
    %10 = arith.index_cast %9 : i32 to index
    %11 = memref.load %arg1[%10] : memref<64xi32, #tpu.memory_space<smem>>
    %12 = arith.index_cast %11 : i32 to index
    %c0_1 = arith.constant 0 : index
    %13 = vector.load %arg2[%12, %c0_1] : memref<32x128xf32, #tpu.memory_space<vmem>>, vector<1x128xf32>
    %c16_i32 = arith.constant 16 : i32
    %14 = arith.addi %0, %c16_i32 : i32
    %15 = arith.addi %14, %c0_i32 : i32
    %16 = arith.index_cast %15 : i32 to index
    %17 = memref.load %arg1[%16] : memref<64xi32, #tpu.memory_space<smem>>
    %18 = arith.index_cast %17 : i32 to index
    %c0_2 = arith.constant 0 : index
    %19 = vector.load %arg2[%18, %c0_2] : memref<32x128xf32, #tpu.memory_space<vmem>>, vector<1x128xf32>
    %c24_i32 = arith.constant 24 : i32
    %20 = arith.addi %0, %c24_i32 : i32
    %21 = arith.addi %20, %c0_i32 : i32
    %22 = arith.index_cast %21 : i32 to index
    %23 = memref.load %arg1[%22] : memref<64xi32, #tpu.memory_space<smem>>
    %24 = arith.index_cast %23 : i32 to index
    %c0_3 = arith.constant 0 : index
    %25 = vector.load %arg2[%24, %c0_3] : memref<32x128xf32, #tpu.memory_space<vmem>>, vector<1x128xf32>
    %c32_i32 = arith.constant 32 : i32
    %26 = arith.addi %0, %c32_i32 : i32
    %27 = arith.addi %26, %c0_i32 : i32
    %28 = arith.index_cast %27 : i32 to index
    %29 = memref.load %arg1[%28] : memref<64xi32, #tpu.memory_space<smem>>
    %30 = arith.index_cast %29 : i32 to index
    %c0_4 = arith.constant 0 : index
    %31 = vector.load %arg2[%30, %c0_4] : memref<32x128xf32, #tpu.memory_space<vmem>>, vector<1x128xf32>
    %c40_i32 = arith.constant 40 : i32
    %32 = arith.addi %0, %c40_i32 : i32
    %33 = arith.addi %32, %c0_i32 : i32
    %34 = arith.index_cast %33 : i32 to index
    %35 = memref.load %arg1[%34] : memref<64xi32, #tpu.memory_space<smem>>
    %36 = arith.index_cast %35 : i32 to index
    %c0_5 = arith.constant 0 : index
    %37 = vector.load %arg2[%36, %c0_5] : memref<32x128xf32, #tpu.memory_space<vmem>>, vector<1x128xf32>
    %c48_i32 = arith.constant 48 : i32
    %38 = arith.addi %0, %c48_i32 : i32
    %39 = arith.addi %38, %c0_i32 : i32
    %40 = arith.index_cast %39 : i32 to index
    %41 = memref.load %arg1[%40] : memref<64xi32, #tpu.memory_space<smem>>
    %42 = arith.index_cast %41 : i32 to index
    %c0_6 = arith.constant 0 : index
    %43 = vector.load %arg2[%42, %c0_6] : memref<32x128xf32, #tpu.memory_space<vmem>>, vector<1x128xf32>
    %c56_i32 = arith.constant 56 : i32
    %44 = arith.addi %0, %c56_i32 : i32
    %45 = arith.addi %44, %c0_i32 : i32
    %46 = arith.index_cast %45 : i32 to index
    %47 = memref.load %arg1[%46] : memref<64xi32, #tpu.memory_space<smem>>
    %48 = arith.index_cast %47 : i32 to index
    %c0_7 = arith.constant 0 : index
    %49 = vector.load %arg2[%48, %c0_7] : memref<32x128xf32, #tpu.memory_space<vmem>>, vector<1x128xf32>
    %50 = tpu.concatenate %7, %13, %19, %25, %31, %37, %43, %49 in 0 : vector<1x128xf32>, vector<1x128xf32>, vector<1x128xf32>, vector<1x128xf32>, vector<1x128xf32>, vector<1x128xf32>, vector<1x128xf32>, vector<1x128xf32> -> vector<8x128xf32>
    %51 = arith.maximumf %1, %50 : vector<8x128xf32>
    %c1_i32 = arith.constant 1 : i32
    %c0_i32_8 = arith.constant 0 : i32
    %52 = arith.addi %0, %c0_i32_8 : i32
    %53 = arith.addi %52, %c1_i32 : i32
    %54 = arith.index_cast %53 : i32 to index
    %55 = memref.load %arg1[%54] : memref<64xi32, #tpu.memory_space<smem>>
    %56 = arith.index_cast %55 : i32 to index
    %c0_9 = arith.constant 0 : index
    %57 = vector.load %arg2[%56, %c0_9] : memref<32x128xf32, #tpu.memory_space<vmem>>, vector<1x128xf32>
    %c8_i32_10 = arith.constant 8 : i32
    %58 = arith.addi %0, %c8_i32_10 : i32
    %59 = arith.addi %58, %c1_i32 : i32
    %60 = arith.index_cast %59 : i32 to index
    %61 = memref.load %arg1[%60] : memref<64xi32, #tpu.memory_space<smem>>
    %62 = arith.index_cast %61 : i32 to index
    %c0_11 = arith.constant 0 : index
    %63 = vector.load %arg2[%62, %c0_11] : memref<32x128xf32, #tpu.memory_space<vmem>>, vector<1x128xf32>
    %c16_i32_12 = arith.constant 16 : i32
    %64 = arith.addi %0, %c16_i32_12 : i32
    %65 = arith.addi %64, %c1_i32 : i32
    %66 = arith.index_cast %65 : i32 to index
    %67 = memref.load %arg1[%66] : memref<64xi32, #tpu.memory_space<smem>>
    %68 = arith.index_cast %67 : i32 to index
    %c0_13 = arith.constant 0 : index
    %69 = vector.load %arg2[%68, %c0_13] : memref<32x128xf32, #tpu.memory_space<vmem>>, vector<1x128xf32>
    %c24_i32_14 = arith.constant 24 : i32
    %70 = arith.addi %0, %c24_i32_14 : i32
    %71 = arith.addi %70, %c1_i32 : i32
    %72 = arith.index_cast %71 : i32 to index
    %73 = memref.load %arg1[%72] : memref<64xi32, #tpu.memory_space<smem>>
    %74 = arith.index_cast %73 : i32 to index
    %c0_15 = arith.constant 0 : index
    %75 = vector.load %arg2[%74, %c0_15] : memref<32x128xf32, #tpu.memory_space<vmem>>, vector<1x128xf32>
    %c32_i32_16 = arith.constant 32 : i32
    %76 = arith.addi %0, %c32_i32_16 : i32
    %77 = arith.addi %76, %c1_i32 : i32
    %78 = arith.index_cast %77 : i32 to index
    %79 = memref.load %arg1[%78] : memref<64xi32, #tpu.memory_space<smem>>
    %80 = arith.index_cast %79 : i32 to index
    %c0_17 = arith.constant 0 : index
    %81 = vector.load %arg2[%80, %c0_17] : memref<32x128xf32, #tpu.memory_space<vmem>>, vector<1x128xf32>
    %c40_i32_18 = arith.constant 40 : i32
    %82 = arith.addi %0, %c40_i32_18 : i32
    %83 = arith.addi %82, %c1_i32 : i32
    %84 = arith.index_cast %83 : i32 to index
    %85 = memref.load %arg1[%84] : memref<64xi32, #tpu.memory_space<smem>>
    %86 = arith.index_cast %85 : i32 to index
    %c0_19 = arith.constant 0 : index
    %87 = vector.load %arg2[%86, %c0_19] : memref<32x128xf32, #tpu.memory_space<vmem>>, vector<1x128xf32>
    %c48_i32_20 = arith.constant 48 : i32
    %88 = arith.addi %0, %c48_i32_20 : i32
    %89 = arith.addi %88, %c1_i32 : i32
    %90 = arith.index_cast %89 : i32 to index
    %91 = memref.load %arg1[%90] : memref<64xi32, #tpu.memory_space<smem>>
    %92 = arith.index_cast %91 : i32 to index
    %c0_21 = arith.constant 0 : index
    %93 = vector.load %arg2[%92, %c0_21] : memref<32x128xf32, #tpu.memory_space<vmem>>, vector<1x128xf32>
    %c56_i32_22 = arith.constant 56 : i32
    %94 = arith.addi %0, %c56_i32_22 : i32
    %95 = arith.addi %94, %c1_i32 : i32
    %96 = arith.index_cast %95 : i32 to index
    %97 = memref.load %arg1[%96] : memref<64xi32, #tpu.memory_space<smem>>
    %98 = arith.index_cast %97 : i32 to index
    %c0_23 = arith.constant 0 : index
    %99 = vector.load %arg2[%98, %c0_23] : memref<32x128xf32, #tpu.memory_space<vmem>>, vector<1x128xf32>
    %100 = tpu.concatenate %57, %63, %69, %75, %81, %87, %93, %99 in 0 : vector<1x128xf32>, vector<1x128xf32>, vector<1x128xf32>, vector<1x128xf32>, vector<1x128xf32>, vector<1x128xf32>, vector<1x128xf32>, vector<1x128xf32> -> vector<8x128xf32>
    %101 = arith.maximumf %51, %100 : vector<8x128xf32>
    %c2_i32 = arith.constant 2 : i32
    %c0_i32_24 = arith.constant 0 : i32
    %102 = arith.addi %0, %c0_i32_24 : i32
    %103 = arith.addi %102, %c2_i32 : i32
    %104 = arith.index_cast %103 : i32 to index
    %105 = memref.load %arg1[%104] : memref<64xi32, #tpu.memory_space<smem>>
    %106 = arith.index_cast %105 : i32 to index
    %c0_25 = arith.constant 0 : index
    %107 = vector.load %arg2[%106, %c0_25] : memref<32x128xf32, #tpu.memory_space<vmem>>, vector<1x128xf32>
    %c8_i32_26 = arith.constant 8 : i32
    %108 = arith.addi %0, %c8_i32_26 : i32
    %109 = arith.addi %108, %c2_i32 : i32
    %110 = arith.index_cast %109 : i32 to index
    %111 = memref.load %arg1[%110] : memref<64xi32, #tpu.memory_space<smem>>
    %112 = arith.index_cast %111 : i32 to index
    %c0_27 = arith.constant 0 : index
    %113 = vector.load %arg2[%112, %c0_27] : memref<32x128xf32, #tpu.memory_space<vmem>>, vector<1x128xf32>
    %c16_i32_28 = arith.constant 16 : i32
    %114 = arith.addi %0, %c16_i32_28 : i32
    %115 = arith.addi %114, %c2_i32 : i32
    %116 = arith.index_cast %115 : i32 to index
    %117 = memref.load %arg1[%116] : memref<64xi32, #tpu.memory_space<smem>>
    %118 = arith.index_cast %117 : i32 to index
    %c0_29 = arith.constant 0 : index
    %119 = vector.load %arg2[%118, %c0_29] : memref<32x128xf32, #tpu.memory_space<vmem>>, vector<1x128xf32>
    %c24_i32_30 = arith.constant 24 : i32
    %120 = arith.addi %0, %c24_i32_30 : i32
    %121 = arith.addi %120, %c2_i32 : i32
    %122 = arith.index_cast %121 : i32 to index
    %123 = memref.load %arg1[%122] : memref<64xi32, #tpu.memory_space<smem>>
    %124 = arith.index_cast %123 : i32 to index
    %c0_31 = arith.constant 0 : index
    %125 = vector.load %arg2[%124, %c0_31] : memref<32x128xf32, #tpu.memory_space<vmem>>, vector<1x128xf32>
    %c32_i32_32 = arith.constant 32 : i32
    %126 = arith.addi %0, %c32_i32_32 : i32
    %127 = arith.addi %126, %c2_i32 : i32
    %128 = arith.index_cast %127 : i32 to index
    %129 = memref.load %arg1[%128] : memref<64xi32, #tpu.memory_space<smem>>
    %130 = arith.index_cast %129 : i32 to index
    %c0_33 = arith.constant 0 : index
    %131 = vector.load %arg2[%130, %c0_33] : memref<32x128xf32, #tpu.memory_space<vmem>>, vector<1x128xf32>
    %c40_i32_34 = arith.constant 40 : i32
    %132 = arith.addi %0, %c40_i32_34 : i32
    %133 = arith.addi %132, %c2_i32 : i32
    %134 = arith.index_cast %133 : i32 to index
    %135 = memref.load %arg1[%134] : memref<64xi32, #tpu.memory_space<smem>>
    %136 = arith.index_cast %135 : i32 to index
    %c0_35 = arith.constant 0 : index
    %137 = vector.load %arg2[%136, %c0_35] : memref<32x128xf32, #tpu.memory_space<vmem>>, vector<1x128xf32>
    %c48_i32_36 = arith.constant 48 : i32
    %138 = arith.addi %0, %c48_i32_36 : i32
    %139 = arith.addi %138, %c2_i32 : i32
    %140 = arith.index_cast %139 : i32 to index
    %141 = memref.load %arg1[%140] : memref<64xi32, #tpu.memory_space<smem>>
    %142 = arith.index_cast %141 : i32 to index
    %c0_37 = arith.constant 0 : index
    %143 = vector.load %arg2[%142, %c0_37] : memref<32x128xf32, #tpu.memory_space<vmem>>, vector<1x128xf32>
    %c56_i32_38 = arith.constant 56 : i32
    %144 = arith.addi %0, %c56_i32_38 : i32
    %145 = arith.addi %144, %c2_i32 : i32
    %146 = arith.index_cast %145 : i32 to index
    %147 = memref.load %arg1[%146] : memref<64xi32, #tpu.memory_space<smem>>
    %148 = arith.index_cast %147 : i32 to index
    %c0_39 = arith.constant 0 : index
    %149 = vector.load %arg2[%148, %c0_39] : memref<32x128xf32, #tpu.memory_space<vmem>>, vector<1x128xf32>
    %150 = tpu.concatenate %107, %113, %119, %125, %131, %137, %143, %149 in 0 : vector<1x128xf32>, vector<1x128xf32>, vector<1x128xf32>, vector<1x128xf32>, vector<1x128xf32>, vector<1x128xf32>, vector<1x128xf32>, vector<1x128xf32> -> vector<8x128xf32>
    %151 = arith.maximumf %101, %150 : vector<8x128xf32>
    %c3_i32 = arith.constant 3 : i32
    %c0_i32_40 = arith.constant 0 : i32
    %152 = arith.addi %0, %c0_i32_40 : i32
    %153 = arith.addi %152, %c3_i32 : i32
    %154 = arith.index_cast %153 : i32 to index
    %155 = memref.load %arg1[%154] : memref<64xi32, #tpu.memory_space<smem>>
    %156 = arith.index_cast %155 : i32 to index
    %c0_41 = arith.constant 0 : index
    %157 = vector.load %arg2[%156, %c0_41] : memref<32x128xf32, #tpu.memory_space<vmem>>, vector<1x128xf32>
    %c8_i32_42 = arith.constant 8 : i32
    %158 = arith.addi %0, %c8_i32_42 : i32
    %159 = arith.addi %158, %c3_i32 : i32
    %160 = arith.index_cast %159 : i32 to index
    %161 = memref.load %arg1[%160] : memref<64xi32, #tpu.memory_space<smem>>
    %162 = arith.index_cast %161 : i32 to index
    %c0_43 = arith.constant 0 : index
    %163 = vector.load %arg2[%162, %c0_43] : memref<32x128xf32, #tpu.memory_space<vmem>>, vector<1x128xf32>
    %c16_i32_44 = arith.constant 16 : i32
    %164 = arith.addi %0, %c16_i32_44 : i32
    %165 = arith.addi %164, %c3_i32 : i32
    %166 = arith.index_cast %165 : i32 to index
    %167 = memref.load %arg1[%166] : memref<64xi32, #tpu.memory_space<smem>>
    %168 = arith.index_cast %167 : i32 to index
    %c0_45 = arith.constant 0 : index
    %169 = vector.load %arg2[%168, %c0_45] : memref<32x128xf32, #tpu.memory_space<vmem>>, vector<1x128xf32>
    %c24_i32_46 = arith.constant 24 : i32
    %170 = arith.addi %0, %c24_i32_46 : i32
    %171 = arith.addi %170, %c3_i32 : i32
    %172 = arith.index_cast %171 : i32 to index
    %173 = memref.load %arg1[%172] : memref<64xi32, #tpu.memory_space<smem>>
    %174 = arith.index_cast %173 : i32 to index
    %c0_47 = arith.constant 0 : index
    %175 = vector.load %arg2[%174, %c0_47] : memref<32x128xf32, #tpu.memory_space<vmem>>, vector<1x128xf32>
    %c32_i32_48 = arith.constant 32 : i32
    %176 = arith.addi %0, %c32_i32_48 : i32
    %177 = arith.addi %176, %c3_i32 : i32
    %178 = arith.index_cast %177 : i32 to index
    %179 = memref.load %arg1[%178] : memref<64xi32, #tpu.memory_space<smem>>
    %180 = arith.index_cast %179 : i32 to index
    %c0_49 = arith.constant 0 : index
    %181 = vector.load %arg2[%180, %c0_49] : memref<32x128xf32, #tpu.memory_space<vmem>>, vector<1x128xf32>
    %c40_i32_50 = arith.constant 40 : i32
    %182 = arith.addi %0, %c40_i32_50 : i32
    %183 = arith.addi %182, %c3_i32 : i32
    %184 = arith.index_cast %183 : i32 to index
    %185 = memref.load %arg1[%184] : memref<64xi32, #tpu.memory_space<smem>>
    %186 = arith.index_cast %185 : i32 to index
    %c0_51 = arith.constant 0 : index
    %187 = vector.load %arg2[%186, %c0_51] : memref<32x128xf32, #tpu.memory_space<vmem>>, vector<1x128xf32>
    %c48_i32_52 = arith.constant 48 : i32
    %188 = arith.addi %0, %c48_i32_52 : i32
    %189 = arith.addi %188, %c3_i32 : i32
    %190 = arith.index_cast %189 : i32 to index
    %191 = memref.load %arg1[%190] : memref<64xi32, #tpu.memory_space<smem>>
    %192 = arith.index_cast %191 : i32 to index
    %c0_53 = arith.constant 0 : index
    %193 = vector.load %arg2[%192, %c0_53] : memref<32x128xf32, #tpu.memory_space<vmem>>, vector<1x128xf32>
    %c56_i32_54 = arith.constant 56 : i32
    %194 = arith.addi %0, %c56_i32_54 : i32
    %195 = arith.addi %194, %c3_i32 : i32
    %196 = arith.index_cast %195 : i32 to index
    %197 = memref.load %arg1[%196] : memref<64xi32, #tpu.memory_space<smem>>
    %198 = arith.index_cast %197 : i32 to index
    %c0_55 = arith.constant 0 : index
    %199 = vector.load %arg2[%198, %c0_55] : memref<32x128xf32, #tpu.memory_space<vmem>>, vector<1x128xf32>
    %200 = tpu.concatenate %157, %163, %169, %175, %181, %187, %193, %199 in 0 : vector<1x128xf32>, vector<1x128xf32>, vector<1x128xf32>, vector<1x128xf32>, vector<1x128xf32>, vector<1x128xf32>, vector<1x128xf32>, vector<1x128xf32> -> vector<8x128xf32>
    %201 = arith.maximumf %151, %200 : vector<8x128xf32>
    %c4_i32 = arith.constant 4 : i32
    %c0_i32_56 = arith.constant 0 : i32
    %202 = arith.addi %0, %c0_i32_56 : i32
    %203 = arith.addi %202, %c4_i32 : i32
    %204 = arith.index_cast %203 : i32 to index
    %205 = memref.load %arg1[%204] : memref<64xi32, #tpu.memory_space<smem>>
    %206 = arith.index_cast %205 : i32 to index
    %c0_57 = arith.constant 0 : index
    %207 = vector.load %arg2[%206, %c0_57] : memref<32x128xf32, #tpu.memory_space<vmem>>, vector<1x128xf32>
    %c8_i32_58 = arith.constant 8 : i32
    %208 = arith.addi %0, %c8_i32_58 : i32
    %209 = arith.addi %208, %c4_i32 : i32
    %210 = arith.index_cast %209 : i32 to index
    %211 = memref.load %arg1[%210] : memref<64xi32, #tpu.memory_space<smem>>
    %212 = arith.index_cast %211 : i32 to index
    %c0_59 = arith.constant 0 : index
    %213 = vector.load %arg2[%212, %c0_59] : memref<32x128xf32, #tpu.memory_space<vmem>>, vector<1x128xf32>
    %c16_i32_60 = arith.constant 16 : i32
    %214 = arith.addi %0, %c16_i32_60 : i32
    %215 = arith.addi %214, %c4_i32 : i32
    %216 = arith.index_cast %215 : i32 to index
    %217 = memref.load %arg1[%216] : memref<64xi32, #tpu.memory_space<smem>>
    %218 = arith.index_cast %217 : i32 to index
    %c0_61 = arith.constant 0 : index
    %219 = vector.load %arg2[%218, %c0_61] : memref<32x128xf32, #tpu.memory_space<vmem>>, vector<1x128xf32>
    %c24_i32_62 = arith.constant 24 : i32
    %220 = arith.addi %0, %c24_i32_62 : i32
    %221 = arith.addi %220, %c4_i32 : i32
    %222 = arith.index_cast %221 : i32 to index
    %223 = memref.load %arg1[%222] : memref<64xi32, #tpu.memory_space<smem>>
    %224 = arith.index_cast %223 : i32 to index
    %c0_63 = arith.constant 0 : index
    %225 = vector.load %arg2[%224, %c0_63] : memref<32x128xf32, #tpu.memory_space<vmem>>, vector<1x128xf32>
    %c32_i32_64 = arith.constant 32 : i32
    %226 = arith.addi %0, %c32_i32_64 : i32
    %227 = arith.addi %226, %c4_i32 : i32
    %228 = arith.index_cast %227 : i32 to index
    %229 = memref.load %arg1[%228] : memref<64xi32, #tpu.memory_space<smem>>
    %230 = arith.index_cast %229 : i32 to index
    %c0_65 = arith.constant 0 : index
    %231 = vector.load %arg2[%230, %c0_65] : memref<32x128xf32, #tpu.memory_space<vmem>>, vector<1x128xf32>
    %c40_i32_66 = arith.constant 40 : i32
    %232 = arith.addi %0, %c40_i32_66 : i32
    %233 = arith.addi %232, %c4_i32 : i32
    %234 = arith.index_cast %233 : i32 to index
    %235 = memref.load %arg1[%234] : memref<64xi32, #tpu.memory_space<smem>>
    %236 = arith.index_cast %235 : i32 to index
    %c0_67 = arith.constant 0 : index
    %237 = vector.load %arg2[%236, %c0_67] : memref<32x128xf32, #tpu.memory_space<vmem>>, vector<1x128xf32>
    %c48_i32_68 = arith.constant 48 : i32
    %238 = arith.addi %0, %c48_i32_68 : i32
    %239 = arith.addi %238, %c4_i32 : i32
    %240 = arith.index_cast %239 : i32 to index
    %241 = memref.load %arg1[%240] : memref<64xi32, #tpu.memory_space<smem>>
    %242 = arith.index_cast %241 : i32 to index
    %c0_69 = arith.constant 0 : index
    %243 = vector.load %arg2[%242, %c0_69] : memref<32x128xf32, #tpu.memory_space<vmem>>, vector<1x128xf32>
    %c56_i32_70 = arith.constant 56 : i32
    %244 = arith.addi %0, %c56_i32_70 : i32
    %245 = arith.addi %244, %c4_i32 : i32
    %246 = arith.index_cast %245 : i32 to index
    %247 = memref.load %arg1[%246] : memref<64xi32, #tpu.memory_space<smem>>
    %248 = arith.index_cast %247 : i32 to index
    %c0_71 = arith.constant 0 : index
    %249 = vector.load %arg2[%248, %c0_71] : memref<32x128xf32, #tpu.memory_space<vmem>>, vector<1x128xf32>
    %250 = tpu.concatenate %207, %213, %219, %225, %231, %237, %243, %249 in 0 : vector<1x128xf32>, vector<1x128xf32>, vector<1x128xf32>, vector<1x128xf32>, vector<1x128xf32>, vector<1x128xf32>, vector<1x128xf32>, vector<1x128xf32> -> vector<8x128xf32>
    %251 = arith.maximumf %201, %250 : vector<8x128xf32>
    %c5_i32 = arith.constant 5 : i32
    %c0_i32_72 = arith.constant 0 : i32
    %252 = arith.addi %0, %c0_i32_72 : i32
    %253 = arith.addi %252, %c5_i32 : i32
    %254 = arith.index_cast %253 : i32 to index
    %255 = memref.load %arg1[%254] : memref<64xi32, #tpu.memory_space<smem>>
    %256 = arith.index_cast %255 : i32 to index
    %c0_73 = arith.constant 0 : index
    %257 = vector.load %arg2[%256, %c0_73] : memref<32x128xf32, #tpu.memory_space<vmem>>, vector<1x128xf32>
    %c8_i32_74 = arith.constant 8 : i32
    %258 = arith.addi %0, %c8_i32_74 : i32
    %259 = arith.addi %258, %c5_i32 : i32
    %260 = arith.index_cast %259 : i32 to index
    %261 = memref.load %arg1[%260] : memref<64xi32, #tpu.memory_space<smem>>
    %262 = arith.index_cast %261 : i32 to index
    %c0_75 = arith.constant 0 : index
    %263 = vector.load %arg2[%262, %c0_75] : memref<32x128xf32, #tpu.memory_space<vmem>>, vector<1x128xf32>
    %c16_i32_76 = arith.constant 16 : i32
    %264 = arith.addi %0, %c16_i32_76 : i32
    %265 = arith.addi %264, %c5_i32 : i32
    %266 = arith.index_cast %265 : i32 to index
    %267 = memref.load %arg1[%266] : memref<64xi32, #tpu.memory_space<smem>>
    %268 = arith.index_cast %267 : i32 to index
    %c0_77 = arith.constant 0 : index
    %269 = vector.load %arg2[%268, %c0_77] : memref<32x128xf32, #tpu.memory_space<vmem>>, vector<1x128xf32>
    %c24_i32_78 = arith.constant 24 : i32
    %270 = arith.addi %0, %c24_i32_78 : i32
    %271 = arith.addi %270, %c5_i32 : i32
    %272 = arith.index_cast %271 : i32 to index
    %273 = memref.load %arg1[%272] : memref<64xi32, #tpu.memory_space<smem>>
    %274 = arith.index_cast %273 : i32 to index
    %c0_79 = arith.constant 0 : index
    %275 = vector.load %arg2[%274, %c0_79] : memref<32x128xf32, #tpu.memory_space<vmem>>, vector<1x128xf32>
    %c32_i32_80 = arith.constant 32 : i32
    %276 = arith.addi %0, %c32_i32_80 : i32
    %277 = arith.addi %276, %c5_i32 : i32
    %278 = arith.index_cast %277 : i32 to index
    %279 = memref.load %arg1[%278] : memref<64xi32, #tpu.memory_space<smem>>
    %280 = arith.index_cast %279 : i32 to index
    %c0_81 = arith.constant 0 : index
    %281 = vector.load %arg2[%280, %c0_81] : memref<32x128xf32, #tpu.memory_space<vmem>>, vector<1x128xf32>
    %c40_i32_82 = arith.constant 40 : i32
    %282 = arith.addi %0, %c40_i32_82 : i32
    %283 = arith.addi %282, %c5_i32 : i32
    %284 = arith.index_cast %283 : i32 to index
    %285 = memref.load %arg1[%284] : memref<64xi32, #tpu.memory_space<smem>>
    %286 = arith.index_cast %285 : i32 to index
    %c0_83 = arith.constant 0 : index
    %287 = vector.load %arg2[%286, %c0_83] : memref<32x128xf32, #tpu.memory_space<vmem>>, vector<1x128xf32>
    %c48_i32_84 = arith.constant 48 : i32
    %288 = arith.addi %0, %c48_i32_84 : i32
    %289 = arith.addi %288, %c5_i32 : i32
    %290 = arith.index_cast %289 : i32 to index
    %291 = memref.load %arg1[%290] : memref<64xi32, #tpu.memory_space<smem>>
    %292 = arith.index_cast %291 : i32 to index
    %c0_85 = arith.constant 0 : index
    %293 = vector.load %arg2[%292, %c0_85] : memref<32x128xf32, #tpu.memory_space<vmem>>, vector<1x128xf32>
    %c56_i32_86 = arith.constant 56 : i32
    %294 = arith.addi %0, %c56_i32_86 : i32
    %295 = arith.addi %294, %c5_i32 : i32
    %296 = arith.index_cast %295 : i32 to index
    %297 = memref.load %arg1[%296] : memref<64xi32, #tpu.memory_space<smem>>
    %298 = arith.index_cast %297 : i32 to index
    %c0_87 = arith.constant 0 : index
    %299 = vector.load %arg2[%298, %c0_87] : memref<32x128xf32, #tpu.memory_space<vmem>>, vector<1x128xf32>
    %300 = tpu.concatenate %257, %263, %269, %275, %281, %287, %293, %299 in 0 : vector<1x128xf32>, vector<1x128xf32>, vector<1x128xf32>, vector<1x128xf32>, vector<1x128xf32>, vector<1x128xf32>, vector<1x128xf32>, vector<1x128xf32> -> vector<8x128xf32>
    %301 = arith.maximumf %251, %300 : vector<8x128xf32>
    %c6_i32 = arith.constant 6 : i32
    %c0_i32_88 = arith.constant 0 : i32
    %302 = arith.addi %0, %c0_i32_88 : i32
    %303 = arith.addi %302, %c6_i32 : i32
    %304 = arith.index_cast %303 : i32 to index
    %305 = memref.load %arg1[%304] : memref<64xi32, #tpu.memory_space<smem>>
    %306 = arith.index_cast %305 : i32 to index
    %c0_89 = arith.constant 0 : index
    %307 = vector.load %arg2[%306, %c0_89] : memref<32x128xf32, #tpu.memory_space<vmem>>, vector<1x128xf32>
    %c8_i32_90 = arith.constant 8 : i32
    %308 = arith.addi %0, %c8_i32_90 : i32
    %309 = arith.addi %308, %c6_i32 : i32
    %310 = arith.index_cast %309 : i32 to index
    %311 = memref.load %arg1[%310] : memref<64xi32, #tpu.memory_space<smem>>
    %312 = arith.index_cast %311 : i32 to index
    %c0_91 = arith.constant 0 : index
    %313 = vector.load %arg2[%312, %c0_91] : memref<32x128xf32, #tpu.memory_space<vmem>>, vector<1x128xf32>
    %c16_i32_92 = arith.constant 16 : i32
    %314 = arith.addi %0, %c16_i32_92 : i32
    %315 = arith.addi %314, %c6_i32 : i32
    %316 = arith.index_cast %315 : i32 to index
    %317 = memref.load %arg1[%316] : memref<64xi32, #tpu.memory_space<smem>>
    %318 = arith.index_cast %317 : i32 to index
    %c0_93 = arith.constant 0 : index
    %319 = vector.load %arg2[%318, %c0_93] : memref<32x128xf32, #tpu.memory_space<vmem>>, vector<1x128xf32>
    %c24_i32_94 = arith.constant 24 : i32
    %320 = arith.addi %0, %c24_i32_94 : i32
    %321 = arith.addi %320, %c6_i32 : i32
    %322 = arith.index_cast %321 : i32 to index
    %323 = memref.load %arg1[%322] : memref<64xi32, #tpu.memory_space<smem>>
    %324 = arith.index_cast %323 : i32 to index
    %c0_95 = arith.constant 0 : index
    %325 = vector.load %arg2[%324, %c0_95] : memref<32x128xf32, #tpu.memory_space<vmem>>, vector<1x128xf32>
    %c32_i32_96 = arith.constant 32 : i32
    %326 = arith.addi %0, %c32_i32_96 : i32
    %327 = arith.addi %326, %c6_i32 : i32
    %328 = arith.index_cast %327 : i32 to index
    %329 = memref.load %arg1[%328] : memref<64xi32, #tpu.memory_space<smem>>
    %330 = arith.index_cast %329 : i32 to index
    %c0_97 = arith.constant 0 : index
    %331 = vector.load %arg2[%330, %c0_97] : memref<32x128xf32, #tpu.memory_space<vmem>>, vector<1x128xf32>
    %c40_i32_98 = arith.constant 40 : i32
    %332 = arith.addi %0, %c40_i32_98 : i32
    %333 = arith.addi %332, %c6_i32 : i32
    %334 = arith.index_cast %333 : i32 to index
    %335 = memref.load %arg1[%334] : memref<64xi32, #tpu.memory_space<smem>>
    %336 = arith.index_cast %335 : i32 to index
    %c0_99 = arith.constant 0 : index
    %337 = vector.load %arg2[%336, %c0_99] : memref<32x128xf32, #tpu.memory_space<vmem>>, vector<1x128xf32>
    %c48_i32_100 = arith.constant 48 : i32
    %338 = arith.addi %0, %c48_i32_100 : i32
    %339 = arith.addi %338, %c6_i32 : i32
    %340 = arith.index_cast %339 : i32 to index
    %341 = memref.load %arg1[%340] : memref<64xi32, #tpu.memory_space<smem>>
    %342 = arith.index_cast %341 : i32 to index
    %c0_101 = arith.constant 0 : index
    %343 = vector.load %arg2[%342, %c0_101] : memref<32x128xf32, #tpu.memory_space<vmem>>, vector<1x128xf32>
    %c56_i32_102 = arith.constant 56 : i32
    %344 = arith.addi %0, %c56_i32_102 : i32
    %345 = arith.addi %344, %c6_i32 : i32
    %346 = arith.index_cast %345 : i32 to index
    %347 = memref.load %arg1[%346] : memref<64xi32, #tpu.memory_space<smem>>
    %348 = arith.index_cast %347 : i32 to index
    %c0_103 = arith.constant 0 : index
    %349 = vector.load %arg2[%348, %c0_103] : memref<32x128xf32, #tpu.memory_space<vmem>>, vector<1x128xf32>
    %350 = tpu.concatenate %307, %313, %319, %325, %331, %337, %343, %349 in 0 : vector<1x128xf32>, vector<1x128xf32>, vector<1x128xf32>, vector<1x128xf32>, vector<1x128xf32>, vector<1x128xf32>, vector<1x128xf32>, vector<1x128xf32> -> vector<8x128xf32>
    %351 = arith.maximumf %301, %350 : vector<8x128xf32>
    %c7_i32 = arith.constant 7 : i32
    %c0_i32_104 = arith.constant 0 : i32
    %352 = arith.addi %0, %c0_i32_104 : i32
    %353 = arith.addi %352, %c7_i32 : i32
    %354 = arith.index_cast %353 : i32 to index
    %355 = memref.load %arg1[%354] : memref<64xi32, #tpu.memory_space<smem>>
    %356 = arith.index_cast %355 : i32 to index
    %c0_105 = arith.constant 0 : index
    %357 = vector.load %arg2[%356, %c0_105] : memref<32x128xf32, #tpu.memory_space<vmem>>, vector<1x128xf32>
    %c8_i32_106 = arith.constant 8 : i32
    %358 = arith.addi %0, %c8_i32_106 : i32
    %359 = arith.addi %358, %c7_i32 : i32
    %360 = arith.index_cast %359 : i32 to index
    %361 = memref.load %arg1[%360] : memref<64xi32, #tpu.memory_space<smem>>
    %362 = arith.index_cast %361 : i32 to index
    %c0_107 = arith.constant 0 : index
    %363 = vector.load %arg2[%362, %c0_107] : memref<32x128xf32, #tpu.memory_space<vmem>>, vector<1x128xf32>
    %c16_i32_108 = arith.constant 16 : i32
    %364 = arith.addi %0, %c16_i32_108 : i32
    %365 = arith.addi %364, %c7_i32 : i32
    %366 = arith.index_cast %365 : i32 to index
    %367 = memref.load %arg1[%366] : memref<64xi32, #tpu.memory_space<smem>>
    %368 = arith.index_cast %367 : i32 to index
    %c0_109 = arith.constant 0 : index
    %369 = vector.load %arg2[%368, %c0_109] : memref<32x128xf32, #tpu.memory_space<vmem>>, vector<1x128xf32>
    %c24_i32_110 = arith.constant 24 : i32
    %370 = arith.addi %0, %c24_i32_110 : i32
    %371 = arith.addi %370, %c7_i32 : i32
    %372 = arith.index_cast %371 : i32 to index
    %373 = memref.load %arg1[%372] : memref<64xi32, #tpu.memory_space<smem>>
    %374 = arith.index_cast %373 : i32 to index
    %c0_111 = arith.constant 0 : index
    %375 = vector.load %arg2[%374, %c0_111] : memref<32x128xf32, #tpu.memory_space<vmem>>, vector<1x128xf32>
    %c32_i32_112 = arith.constant 32 : i32
    %376 = arith.addi %0, %c32_i32_112 : i32
    %377 = arith.addi %376, %c7_i32 : i32
    %378 = arith.index_cast %377 : i32 to index
    %379 = memref.load %arg1[%378] : memref<64xi32, #tpu.memory_space<smem>>
    %380 = arith.index_cast %379 : i32 to index
    %c0_113 = arith.constant 0 : index
    %381 = vector.load %arg2[%380, %c0_113] : memref<32x128xf32, #tpu.memory_space<vmem>>, vector<1x128xf32>
    %c40_i32_114 = arith.constant 40 : i32
    %382 = arith.addi %0, %c40_i32_114 : i32
    %383 = arith.addi %382, %c7_i32 : i32
    %384 = arith.index_cast %383 : i32 to index
    %385 = memref.load %arg1[%384] : memref<64xi32, #tpu.memory_space<smem>>
    %386 = arith.index_cast %385 : i32 to index
    %c0_115 = arith.constant 0 : index
    %387 = vector.load %arg2[%386, %c0_115] : memref<32x128xf32, #tpu.memory_space<vmem>>, vector<1x128xf32>
    %c48_i32_116 = arith.constant 48 : i32
    %388 = arith.addi %0, %c48_i32_116 : i32
    %389 = arith.addi %388, %c7_i32 : i32
    %390 = arith.index_cast %389 : i32 to index
    %391 = memref.load %arg1[%390] : memref<64xi32, #tpu.memory_space<smem>>
    %392 = arith.index_cast %391 : i32 to index
    %c0_117 = arith.constant 0 : index
    %393 = vector.load %arg2[%392, %c0_117] : memref<32x128xf32, #tpu.memory_space<vmem>>, vector<1x128xf32>
    %c56_i32_118 = arith.constant 56 : i32
    %394 = arith.addi %0, %c56_i32_118 : i32
    %395 = arith.addi %394, %c7_i32 : i32
    %396 = arith.index_cast %395 : i32 to index
    %397 = memref.load %arg1[%396] : memref<64xi32, #tpu.memory_space<smem>>
    %398 = arith.index_cast %397 : i32 to index
    %c0_119 = arith.constant 0 : index
    %399 = vector.load %arg2[%398, %c0_119] : memref<32x128xf32, #tpu.memory_space<vmem>>, vector<1x128xf32>
    %400 = tpu.concatenate %357, %363, %369, %375, %381, %387, %393, %399 in 0 : vector<1x128xf32>, vector<1x128xf32>, vector<1x128xf32>, vector<1x128xf32>, vector<1x128xf32>, vector<1x128xf32>, vector<1x128xf32>, vector<1x128xf32> -> vector<8x128xf32>
    %401 = arith.maximumf %351, %400 : vector<8x128xf32>
    %c8_i32_120 = arith.constant 8 : i32
    %c0_121 = arith.constant 0 : index
    %c0_122 = arith.constant 0 : index
    %402 = vector.load %arg3[%c0_121, %c0_122] : memref<8x128xf32, #tpu.memory_space<vmem>>, vector<8x128xf32>
    tpu.vector_store %arg3[%c0_121, %c0_122], %401 {strides = array<i32>} : memref<8x128xf32, #tpu.memory_space<vmem>>, vector<8x128xf32>,
    return
  }
  func.func @transform_0(%arg0: i32, %arg1: memref<64xi32, #tpu.memory_space<smem>>) -> (i32, i32) {
    %c0_i32 = arith.constant 0 : i32
    %c0_i32_0 = arith.constant 0 : i32
    %c0_i32_1 = arith.constant 0 : i32
    return %c0_i32, %c0_i32_0 : i32, i32
  }
  func.func @transform_1(%arg0: i32, %arg1: memref<64xi32, #tpu.memory_space<smem>>) -> (i32, i32) {
    %c0_i32 = arith.constant 0 : i32
    %c0_i32_0 = arith.constant 0 : i32
    return %arg0, %c0_i32 : i32, i32
  }
}

</mosaic_0001>

<llo_original>
// kernel: tpu_custom_call.1
$region0: #{tpu_custom_call.1}
  #allocation0 [shape = 'u32[]', space=smem, size = 0x4, offset = 0x4, fixed_abs, tag = 'smem constant byte address 0x4 - core index']
  #allocation1 [shape = 'u32[72,128]{1,0:T(1,128)}', space=vmem, size = 0x9000, scoped, tag = 'internal scratch']
  #allocation2 [shape = 's32[1]{0}', space=sflag, size = 0x4, scoped, tag = 'scoped memory for tpu_custom_call.1']
  #allocation3 [shape = 'u8[512]{0}', space=smem, size = 0x200, scoped, tag = 'prefetched SMEM operand 0']
  %s0 = inlined_call_operand.hbm [shape: s32[64], index: 0, kind: input, shape index: {}]
  %s1 = inlined_call_operand.hbm [shape: f32[32,128], index: 1, kind: input, shape index: {}]
  %s2 = inlined_call_operand.hbm [shape: f32[8,128], index: 2, kind: output, shape index: {}]
  %s3 = sld [smem:[#allocation0]]
  $region18: #{tpu_custom_call.1} parent=0
    _
  %s5 = ssub.s32 1, %s3
  %s6 = scalar_select 0, %s5, %s3
  %s8 = sshll.u32 %s0, 4
  %s9 = int_to_ptr.hbm [resolvable:$true] %s8
  %11 = dma.hbm_to_smem %s9, 16, [#allocation3], [#allocation2]
  %13 = dma.done [#allocation2], 16
  %14 = sfence
  $region1: #{tpu_custom_call.1} parent=0
    #allocation4 [shape = 'u8[16384]{0}', space=vmem, size = 0x4000, scoped, tag = 'input window, operand 1, single buffered']
    #allocation5 [shape = 's32[1]{0}', space=sflag, size = 0x4, scoped, tag = 'scoped memory for tpu_custom_call.1']
    #allocation6 [shape = 's32[1]{0}', space=sflag, size = 0x4, scoped, tag = 'scoped memory for tpu_custom_call.1']
    #allocation7 [shape = 'u8[4096]{0}', space=vmem, size = 0x1000, scoped, tag = 'output window, operand 0, single buffered']
    %15 = vsyncpa [#allocation5], 0
    %16 = vsyncpa [#allocation6], 0
    // Predicated region
    $region2: #{tpu_custom_call.1} parent=1 // pred_check
      _
    $region3: #{tpu_custom_call.1} parent=1 // pred_check_branch
      %18 = sbr.rel (0) target = $region5
    $region4: #{tpu_custom_call.1} parent=1 // pred_region
      %20 = vsyncadd [#allocation5], 0
      %s21 = sshll.u32 %s1, 4
      %s22 = int_to_ptr.hbm [resolvable:$true] %s21
      %s23 = sshll.u32 [#allocation4], 4
      %s24 = int_to_ptr.vmem [resolvable:$true] %s23
      %29 = dma.hbm_to_vmem [thread:$0]  %s22, 512, %s24, [#allocation5], 128, 128, 8
    $region5: #{tpu_custom_call.1} parent=1 // pred_fallthru
      _
    // Predicated region
    $region6: #{tpu_custom_call.1} parent=1 // pred_check
      _
    $region7: #{tpu_custom_call.1} parent=1 // pred_check_branch
      %31 = sbr.rel (0) target = $region9
    $region8: #{tpu_custom_call.1} parent=1 // pred_region
      %33 = dma.done [#allocation5], 512
    $region9: #{tpu_custom_call.1} parent=1 // pred_fallthru
      _
    %s34 = smul.u32 0, 64
    %s35 = sld [smem:[#allocation3 + %s34]]
    %s36 = scalar_lea.vmem [#allocation4], %s35
    %v37 = vld [vmem:[%s36] sm:$0x1]
    %s38 = sadd.s32 %s34, 8
    %s39 = sld [smem:[#allocation3 + %s38]]
    %s40 = scalar_lea.vmem [#allocation4], %s39
    %v41 = vld [vmem:[%s40] sm:$0x1]
    %s42 = sadd.s32 %s34, 16
    %s43 = sld [smem:[#allocation3 + %s42]]
    %s44 = scalar_lea.vmem [#allocation4], %s43
    %v45 = vld [vmem:[%s44] sm:$0x1]
    %s46 = sadd.s32 %s34, 24
    %s47 = sld [smem:[#allocation3 + %s46]]
    %s48 = scalar_lea.vmem [#allocation4], %s47
    %v49 = vld [vmem:[%s48] sm:$0x1]
    %s50 = sadd.s32 %s34, 32
    %s51 = sld [smem:[#allocation3 + %s50]]
    %s52 = scalar_lea.vmem [#allocation4], %s51
    %v53 = vld [vmem:[%s52] sm:$0x1]
    %s54 = sadd.s32 %s34, 40
    %s55 = sld [smem:[#allocation3 + %s54]]
    %s56 = scalar_lea.vmem [#allocation4], %s55
    %v57 = vld [vmem:[%s56] sm:$0x1]
    %s58 = sadd.s32 %s34, 48
    %s59 = sld [smem:[#allocation3 + %s58]]
    %s60 = scalar_lea.vmem [#allocation4], %s59
    %v61 = vld [vmem:[%s60] sm:$0x1]
    %s62 = sadd.s32 %s34, 56
    %s63 = sld [smem:[#allocation3 + %s62]]
    %s64 = scalar_lea.vmem [#allocation4], %s63
    %v65 = vld [vmem:[%s64] sm:$0x1]
    %v67 = vrot.slane %v41, 7
    %v70 = vrot.slane %v45, 6
    %v73 = vrot.slane %v49, 5
    %v76 = vrot.slane %v53, 4
    %v79 = vrot.slane %v57, 3
    %v82 = vrot.slane %v61, 2
    %v85 = vrot.slane %v65, 1
    %vm87 = vcmask 1040384
    %v88 = vsel %vm87, %v37, %v67
    %vm89 = vcmask 1041408
    %v90 = vsel %vm89, %v88, %v70
    %vm91 = vcmask 1042432
    %v92 = vsel %vm91, %v90, %v73
    %vm93 = vcmask 1043456
    %v94 = vsel %vm93, %v92, %v76
    %vm95 = vcmask 1044480
    %v96 = vsel %vm95, %v94, %v79
    %vm97 = vcmask 1045504
    %v98 = vsel %vm97, %v96, %v82
    %vm99 = vcmask 1046528
    %v100 = vsel %vm99, %v98, %v85
    %s101 = sadd.s32 %s34, 1
    %s102 = sld [smem:[#allocation3 + %s101]]
    %s103 = scalar_lea.vmem [#allocation4], %s102
    %v104 = vld [vmem:[%s103] sm:$0x1]
    %s105 = sadd.s32 %s34, 9
    %s106 = sld [smem:[#allocation3 + %s105]]
    %s107 = scalar_lea.vmem [#allocation4], %s106
    %v108 = vld [vmem:[%s107] sm:$0x1]
    %s109 = sadd.s32 %s34, 17
    %s110 = sld [smem:[#allocation3 + %s109]]
    %s111 = scalar_lea.vmem [#allocation4], %s110
    %v112 = vld [vmem:[%s111] sm:$0x1]
    %s113 = sadd.s32 %s34, 25
    %s114 = sld [smem:[#allocation3 + %s113]]
    %s115 = scalar_lea.vmem [#allocation4], %s114
    %v116 = vld [vmem:[%s115] sm:$0x1]
    %s117 = sadd.s32 %s34, 33
    %s118 = sld [smem:[#allocation3 + %s117]]
    %s119 = scalar_lea.vmem [#allocation4], %s118
    %v120 = vld [vmem:[%s119] sm:$0x1]
    %s121 = sadd.s32 %s34, 41
    %s122 = sld [smem:[#allocation3 + %s121]]
    %s123 = scalar_lea.vmem [#allocation4], %s122
    %v124 = vld [vmem:[%s123] sm:$0x1]
    %s125 = sadd.s32 %s34, 49
    %s126 = sld [smem:[#allocation3 + %s125]]
    %s127 = scalar_lea.vmem [#allocation4], %s126
    %v128 = vld [vmem:[%s127] sm:$0x1]
    %s129 = sadd.s32 %s34, 57
    %s130 = sld [smem:[#allocation3 + %s129]]
    %s131 = scalar_lea.vmem [#allocation4], %s130
    %v132 = vld [vmem:[%s131] sm:$0x1]
    %v134 = vrot.slane %v108, 7
    %v137 = vrot.slane %v112, 6
    %v140 = vrot.slane %v116, 5
    %v143 = vrot.slane %v120, 4
    %v146 = vrot.slane %v124, 3
    %v149 = vrot.slane %v128, 2
    %v152 = vrot.slane %v132, 1
    %v154 = vsel %vm87, %v104, %v134
    %v155 = vsel %vm89, %v154, %v137
    %v156 = vsel %vm91, %v155, %v140
    %v157 = vsel %vm93, %v156, %v143
    %v158 = vsel %vm95, %v157, %v146
    %v159 = vsel %vm97, %v158, %v149
    %v160 = vsel %vm99, %v159, %v152
    %v161 = vmax.f32 %v100, %v160
    %s162 = sadd.s32 %s34, 2
    %s163 = sld [smem:[#allocation3 + %s162]]
    %s164 = scalar_lea.vmem [#allocation4], %s163
    %v165 = vld [vmem:[%s164] sm:$0x1]
    %s166 = sadd.s32 %s34, 10
    %s167 = sld [smem:[#allocation3 + %s166]]
    %s168 = scalar_lea.vmem [#allocation4], %s167
    %v169 = vld [vmem:[%s168] sm:$0x1]
    %s170 = sadd.s32 %s34, 18
    %s171 = sld [smem:[#allocation3 + %s170]]
    %s172 = scalar_lea.vmem [#allocation4], %s171
    %v173 = vld [vmem:[%s172] sm:$0x1]
    %s174 = sadd.s32 %s34, 26
    %s175 = sld [smem:[#allocation3 + %s174]]
    %s176 = scalar_lea.vmem [#allocation4], %s175
    %v177 = vld [vmem:[%s176] sm:$0x1]
    %s178 = sadd.s32 %s34, 34
    %s179 = sld [smem:[#allocation3 + %s178]]
    %s180 = scalar_lea.vmem [#allocation4], %s179
    %v181 = vld [vmem:[%s180] sm:$0x1]
    %s182 = sadd.s32 %s34, 42
    %s183 = sld [smem:[#allocation3 + %s182]]
    %s184 = scalar_lea.vmem [#allocation4], %s183
    %v185 = vld [vmem:[%s184] sm:$0x1]
    %s186 = sadd.s32 %s34, 50
    %s187 = sld [smem:[#allocation3 + %s186]]
    %s188 = scalar_lea.vmem [#allocation4], %s187
    %v189 = vld [vmem:[%s188] sm:$0x1]
    %s190 = sadd.s32 %s34, 58
    %s191 = sld [smem:[#allocation3 + %s190]]
    %s192 = scalar_lea.vmem [#allocation4], %s191
    %v193 = vld [vmem:[%s192] sm:$0x1]
    %v195 = vrot.slane %v169, 7
    %v198 = vrot.slane %v173, 6
    %v201 = vrot.slane %v177, 5
    %v204 = vrot.slane %v181, 4
    %v207 = vrot.slane %v185, 3
    %v210 = vrot.slane %v189, 2
    %v213 = vrot.slane %v193, 1
    %v215 = vsel %vm87, %v165, %v195
    %v216 = vsel %vm89, %v215, %v198
    %v217 = vsel %vm91, %v216, %v201
    %v218 = vsel %vm93, %v217, %v204
    %v219 = vsel %vm95, %v218, %v207
    %v220 = vsel %vm97, %v219, %v210
    %v221 = vsel %vm99, %v220, %v213
    %v222 = vmax.f32 %v161, %v221
    %s223 = sadd.s32 %s34, 3
    %s224 = sld [smem:[#allocation3 + %s223]]
    %s225 = scalar_lea.vmem [#allocation4], %s224
    %v226 = vld [vmem:[%s225] sm:$0x1]
    %s227 = sadd.s32 %s34, 11
    %s228 = sld [smem:[#allocation3 + %s227]]
    %s229 = scalar_lea.vmem [#allocation4], %s228
    %v230 = vld [vmem:[%s229] sm:$0x1]
    %s231 = sadd.s32 %s34, 19
    %s232 = sld [smem:[#allocation3 + %s231]]
    %s233 = scalar_lea.vmem [#allocation4], %s232
    %v234 = vld [vmem:[%s233] sm:$0x1]
    %s235 = sadd.s32 %s34, 27
    %s236 = sld [smem:[#allocation3 + %s235]]
    %s237 = scalar_lea.vmem [#allocation4], %s236
    %v238 = vld [vmem:[%s237] sm:$0x1]
    %s239 = sadd.s32 %s34, 35
    %s240 = sld [smem:[#allocation3 + %s239]]
    %s241 = scalar_lea.vmem [#allocation4], %s240
    %v242 = vld [vmem:[%s241] sm:$0x1]
    %s243 = sadd.s32 %s34, 43
    %s244 = sld [smem:[#allocation3 + %s243]]
    %s245 = scalar_lea.vmem [#allocation4], %s244
    %v246 = vld [vmem:[%s245] sm:$0x1]
    %s247 = sadd.s32 %s34, 51
    %s248 = sld [smem:[#allocation3 + %s247]]
    %s249 = scalar_lea.vmem [#allocation4], %s248
    %v250 = vld [vmem:[%s249] sm:$0x1]
    %s251 = sadd.s32 %s34, 59
    %s252 = sld [smem:[#allocation3 + %s251]]
    %s253 = scalar_lea.vmem [#allocation4], %s252
    %v254 = vld [vmem:[%s253] sm:$0x1]
    %v256 = vrot.slane %v230, 7
    %v259 = vrot.slane %v234, 6
    %v262 = vrot.slane %v238, 5
    %v265 = vrot.slane %v242, 4
    %v268 = vrot.slane %v246, 3
    %v271 = vrot.slane %v250, 2
    %v274 = vrot.slane %v254, 1
    %v276 = vsel %vm87, %v226, %v256
    %v277 = vsel %vm89, %v276, %v259
    %v278 = vsel %vm91, %v277, %v262
    %v279 = vsel %vm93, %v278, %v265
    %v280 = vsel %vm95, %v279, %v268
    %v281 = vsel %vm97, %v280, %v271
    %v282 = vsel %vm99, %v281, %v274
    %v283 = vmax.f32 %v222, %v282
    %s284 = sadd.s32 %s34, 4
    %s285 = sld [smem:[#allocation3 + %s284]]
    %s286 = scalar_lea.vmem [#allocation4], %s285
    %v287 = vld [vmem:[%s286] sm:$0x1]
    %s288 = sadd.s32 %s34, 12
    %s289 = sld [smem:[#allocation3 + %s288]]
    %s290 = scalar_lea.vmem [#allocation4], %s289
    %v291 = vld [vmem:[%s290] sm:$0x1]
    %s292 = sadd.s32 %s34, 20
    %s293 = sld [smem:[#allocation3 + %s292]]
    %s294 = scalar_lea.vmem [#allocation4], %s293
    %v295 = vld [vmem:[%s294] sm:$0x1]
    %s296 = sadd.s32 %s34, 28
    %s297 = sld [smem:[#allocation3 + %s296]]
    %s298 = scalar_lea.vmem [#allocation4], %s297
    %v299 = vld [vmem:[%s298] sm:$0x1]
    %s300 = sadd.s32 %s34, 36
    %s301 = sld [smem:[#allocation3 + %s300]]
    %s302 = scalar_lea.vmem [#allocation4], %s301
    %v303 = vld [vmem:[%s302] sm:$0x1]
    %s304 = sadd.s32 %s34, 44
    %s305 = sld [smem:[#allocation3 + %s304]]
    %s306 = scalar_lea.vmem [#allocation4], %s305
    %v307 = vld [vmem:[%s306] sm:$0x1]
    %s308 = sadd.s32 %s34, 52
    %s309 = sld [smem:[#allocation3 + %s308]]
    %s310 = scalar_lea.vmem [#allocation4], %s309
    %v311 = vld [vmem:[%s310] sm:$0x1]
    %s312 = sadd.s32 %s34, 60
    %s313 = sld [smem:[#allocation3 + %s312]]
    %s314 = scalar_lea.vmem [#allocation4], %s313
    %v315 = vld [vmem:[%s314] sm:$0x1]
    %v317 = vrot.slane %v291, 7
    %v320 = vrot.slane %v295, 6
    %v323 = vrot.slane %v299, 5
    %v326 = vrot.slane %v303, 4
    %v329 = vrot.slane %v307, 3
    %v332 = vrot.slane %v311, 2
    %v335 = vrot.slane %v315, 1
    %v337 = vsel %vm87, %v287, %v317
    %v338 = vsel %vm89, %v337, %v320
    %v339 = vsel %vm91, %v338, %v323
    %v340 = vsel %vm93, %v339, %v326
    %v341 = vsel %vm95, %v340, %v329
    %v342 = vsel %vm97, %v341, %v332
    %v343 = vsel %vm99, %v342, %v335
    %v344 = vmax.f32 %v283, %v343
    %s345 = sadd.s32 %s34, 5
    %s346 = sld [smem:[#allocation3 + %s345]]
    %s347 = scalar_lea.vmem [#allocation4], %s346
    %v348 = vld [vmem:[%s347] sm:$0x1]
    %s349 = sadd.s32 %s34, 13
    %s350 = sld [smem:[#allocation3 + %s349]]
    %s351 = scalar_lea.vmem [#allocation4], %s350
    %v352 = vld [vmem:[%s351] sm:$0x1]
    %s353 = sadd.s32 %s34, 21
    %s354 = sld [smem:[#allocation3 + %s353]]
    %s355 = scalar_lea.vmem [#allocation4], %s354
    %v356 = vld [vmem:[%s355] sm:$0x1]
    %s357 = sadd.s32 %s34, 29
    %s358 = sld [smem:[#allocation3 + %s357]]
    %s359 = scalar_lea.vmem [#allocation4], %s358
    %v360 = vld [vmem:[%s359] sm:$0x1]
    %s361 = sadd.s32 %s34, 37
    %s362 = sld [smem:[#allocation3 + %s361]]
    %s363 = scalar_lea.vmem [#allocation4], %s362
    %v364 = vld [vmem:[%s363] sm:$0x1]
    %s365 = sadd.s32 %s34, 45
    %s366 = sld [smem:[#allocation3 + %s365]]
    %s367 = scalar_lea.vmem [#allocation4], %s366
    %v368 = vld [vmem:[%s367] sm:$0x1]
    %s369 = sadd.s32 %s34, 53
    %s370 = sld [smem:[#allocation3 + %s369]]
    %s371 = scalar_lea.vmem [#allocation4], %s370
    %v372 = vld [vmem:[%s371] sm:$0x1]
    %s373 = sadd.s32 %s34, 61
    %s374 = sld [smem:[#allocation3 + %s373]]
    %s375 = scalar_lea.vmem [#allocation4], %s374
    %v376 = vld [vmem:[%s375] sm:$0x1]
    %v378 = vrot.slane %v352, 7
    %v381 = vrot.slane %v356, 6
    %v384 = vrot.slane %v360, 5
    %v387 = vrot.slane %v364, 4
    %v390 = vrot.slane %v368, 3
    %v393 = vrot.slane %v372, 2
    %v396 = vrot.slane %v376, 1
    %v398 = vsel %vm87, %v348, %v378
    %v399 = vsel %vm89, %v398, %v381
    %v400 = vsel %vm91, %v399, %v384
    %v401 = vsel %vm93, %v400, %v387
    %v402 = vsel %vm95, %v401, %v390
    %v403 = vsel %vm97, %v402, %v393
    %v404 = vsel %vm99, %v403, %v396
    %v405 = vmax.f32 %v344, %v404
    %s406 = sadd.s32 %s34, 6
    %s407 = sld [smem:[#allocation3 + %s406]]
    %s408 = scalar_lea.vmem [#allocation4], %s407
    %v409 = vld [vmem:[%s408] sm:$0x1]
    %s410 = sadd.s32 %s34, 14
    %s411 = sld [smem:[#allocation3 + %s410]]
    %s412 = scalar_lea.vmem [#allocation4], %s411
    %v413 = vld [vmem:[%s412] sm:$0x1]
    %s414 = sadd.s32 %s34, 22
    %s415 = sld [smem:[#allocation3 + %s414]]
    %s416 = scalar_lea.vmem [#allocation4], %s415
    %v417 = vld [vmem:[%s416] sm:$0x1]
    %s418 = sadd.s32 %s34, 30
    %s419 = sld [smem:[#allocation3 + %s418]]
    %s420 = scalar_lea.vmem [#allocation4], %s419
    %v421 = vld [vmem:[%s420] sm:$0x1]
    %s422 = sadd.s32 %s34, 38
    %s423 = sld [smem:[#allocation3 + %s422]]
    %s424 = scalar_lea.vmem [#allocation4], %s423
    %v425 = vld [vmem:[%s424] sm:$0x1]
    %s426 = sadd.s32 %s34, 46
    %s427 = sld [smem:[#allocation3 + %s426]]
    %s428 = scalar_lea.vmem [#allocation4], %s427
    %v429 = vld [vmem:[%s428] sm:$0x1]
    %s430 = sadd.s32 %s34, 54
    %s431 = sld [smem:[#allocation3 + %s430]]
    %s432 = scalar_lea.vmem [#allocation4], %s431
    %v433 = vld [vmem:[%s432] sm:$0x1]
    %s434 = sadd.s32 %s34, 62
    %s435 = sld [smem:[#allocation3 + %s434]]
    %s436 = scalar_lea.vmem [#allocation4], %s435
    %v437 = vld [vmem:[%s436] sm:$0x1]
    %v439 = vrot.slane %v413, 7
    %v442 = vrot.slane %v417, 6
    %v445 = vrot.slane %v421, 5
    %v448 = vrot.slane %v425, 4
    %v451 = vrot.slane %v429, 3
    %v454 = vrot.slane %v433, 2
    %v457 = vrot.slane %v437, 1
    %v459 = vsel %vm87, %v409, %v439
    %v460 = vsel %vm89, %v459, %v442
    %v461 = vsel %vm91, %v460, %v445
    %v462 = vsel %vm93, %v461, %v448
    %v463 = vsel %vm95, %v462, %v451
    %v464 = vsel %vm97, %v463, %v454
    %v465 = vsel %vm99, %v464, %v457
    %v466 = vmax.f32 %v405, %v465
    %s467 = sadd.s32 %s34, 7
    %s468 = sld [smem:[#allocation3 + %s467]]
    %s469 = scalar_lea.vmem [#allocation4], %s468
    %v470 = vld [vmem:[%s469] sm:$0x1]
    %s471 = sadd.s32 %s34, 15
    %s472 = sld [smem:[#allocation3 + %s471]]
    %s473 = scalar_lea.vmem [#allocation4], %s472
    %v474 = vld [vmem:[%s473] sm:$0x1]
    %s475 = sadd.s32 %s34, 23
    %s476 = sld [smem:[#allocation3 + %s475]]
    %s477 = scalar_lea.vmem [#allocation4], %s476
    %v478 = vld [vmem:[%s477] sm:$0x1]
    %s479 = sadd.s32 %s34, 31
    %s480 = sld [smem:[#allocation3 + %s479]]
    %s481 = scalar_lea.vmem [#allocation4], %s480
    %v482 = vld [vmem:[%s481] sm:$0x1]
    %s483 = sadd.s32 %s34, 39
    %s484 = sld [smem:[#allocation3 + %s483]]
    %s485 = scalar_lea.vmem [#allocation4], %s484
    %v486 = vld [vmem:[%s485] sm:$0x1]
    %s487 = sadd.s32 %s34, 47
    %s488 = sld [smem:[#allocation3 + %s487]]
    %s489 = scalar_lea.vmem [#allocation4], %s488
    %v490 = vld [vmem:[%s489] sm:$0x1]
    %s491 = sadd.s32 %s34, 55
    %s492 = sld [smem:[#allocation3 + %s491]]
    %s493 = scalar_lea.vmem [#allocation4], %s492
    %v494 = vld [vmem:[%s493] sm:$0x1]
    %s495 = sadd.s32 %s34, 63
    %s496 = sld [smem:[#allocation3 + %s495]]
    %s497 = scalar_lea.vmem [#allocation4], %s496
    %v498 = vld [vmem:[%s497] sm:$0x1]
    %v500 = vrot.slane %v474, 7
    %v503 = vrot.slane %v478, 6
    %v506 = vrot.slane %v482, 5
    %v509 = vrot.slane %v486, 4
    %v512 = vrot.slane %v490, 3
    %v515 = vrot.slane %v494, 2
    %v518 = vrot.slane %v498, 1
    %v520 = vsel %vm87, %v470, %v500
    %v521 = vsel %vm89, %v520, %v503
    %v522 = vsel %vm91, %v521, %v506
    %v523 = vsel %vm93, %v522, %v509
    %v524 = vsel %vm95, %v523, %v512
    %v525 = vsel %vm97, %v524, %v515
    %v526 = vsel %vm99, %v525, %v518
    %v527 = vmax.f32 %v466, %v526
    %528 = vst [vmem:[#allocation7] sm:$0xff] %v527
    // Predicated region
    $region10: #{tpu_custom_call.1} parent=1 // pred_check
      _
    $region11: #{tpu_custom_call.1} parent=1 // pred_check_branch
      %530 = sbr.rel (0) target = $region13
    $region12: #{tpu_custom_call.1} parent=1 // pred_region
      %532 = vsyncadd [#allocation6], 0
      %s534 = sshll.u32 [#allocation7], 4
      %s535 = int_to_ptr.vmem [resolvable:$true] %s534
      %s536 = sshll.u32 %s2, 4
      %s537 = int_to_ptr.hbm [resolvable:$true] %s536
      %539 = dma.vmem_to_hbm [thread:$0]  %s535, 128, %s537, [#allocation6]
    $region13: #{tpu_custom_call.1} parent=1 // pred_fallthru
      _
    // Predicated region
    $region14: #{tpu_custom_call.1} parent=1 // pred_check
      _
    $region15: #{tpu_custom_call.1} parent=1 // pred_check_branch
      %541 = sbr.rel (0) target = $region17
    $region16: #{tpu_custom_call.1} parent=1 // pred_region
      %543 = dma.done [#allocation6], 128
    $region17: #{tpu_custom_call.1} parent=1 // pred_fallthru
      _
    %544 = vsyncpa [#allocation5], 1
    %545 = vsyncpa [#allocation6], 1

</llo_original>
